<compile_context>
chip_gen: v5e
topology: v5e:2x2
jax: 0.10.0
libtpu: 0.0.40
codegen_flags: <defaults>
</compile_context>

<pallas_src>
import functools

import jax
import jax.numpy as jnp
from jax.experimental import pallas as pl
from jax.experimental.pallas import tpu as pltpu


def _film_kernel(scale_ref, shift_ref, x_ref, o_ref):
    """One grid step == one (TR, TC) tile of the flattened (B*C, H*W) map.

    scale_ref : (TR, 1)  f32   per-row FiLM scale (already includes the +1)
    shift_ref : (TR, 1)  f32   per-row FiLM shift
    x_ref     : (TR, TC) input-dtype feature tile
    o_ref     : (TR, TC) output tile
    """
    x = x_ref[...]
    # scale/shift are f32 and tiny; the MAC runs in f32 in-vreg, the two big
    # HBM streams (x in, o out) stay in the input dtype.
    o_ref[...] = (x * scale_ref[...] + shift_ref[...]).astype(o_ref.dtype)


def _pick_tile(full, base, cap):
    """Largest t <= cap with t % base == 0 and full % t == 0.

    Falls back to the full extent when `full` is not a multiple of `base`
    (a full-extent block is always a legal BlockSpec dim).
    """
    if full % base != 0 or full <= base:
        return full
    t = min(cap, full)
    t -= t % base
    t = max(t, base)
    while full % t != 0:
        t -= base
    return t


@functools.partial(jax.jit, static_argnames=())
def film_conditioning(conv_filters_nchw, context, w_add, b_add, w_mul, b_mul):
    """FiLM conditioning.

    conv_filters_nchw : (B, C, H, W)
    context           : (B, CTX)     float32
    w_add, w_mul      : (CTX, C)     (i.e. nn.Linear weight transposed)
    b_add, b_mul      : (C,)
    returns           : (B, C, H, W), same dtype as conv_filters_nchw
    """
    B, C, H, W = conv_filters_nchw.shape
    HW = H * W
    BC = B * C

    # --- hoisted projections (tiny: B x CTX x C flops, plain JAX) ----------
    ctx32 = context.astype(jnp.float32)
    shift = ctx32 @ w_add.astype(jnp.float32) + b_add.astype(jnp.float32)       # (B, C)
    scale = 1.0 + ctx32 @ w_mul.astype(jnp.float32) + b_mul.astype(jnp.float32)  # (B, C)

    # Row b*C + c of x pairs with (b, c) of scale/shift.
    x_rows = conv_filters_nchw.reshape(BC, HW)          # no transpose, pure view
    scale_rows = scale.reshape(BC, 1)
    shift_rows = shift.reshape(BC, 1)

    # --- tile selection ------------------------------------------------------
    # Big lane-dense tiles: per-grid-step overhead is ~0.35 us, and measured
    # HBM-roofline saturation needs >=512-wide lane tiles, so target ~2 MiB
    # per x block (double-buffered in + out -> <~9 MiB VMEM).
    TR = _pick_tile(BC, 8, 256)
    bytes_per_elem = jnp.dtype(conv_filters_nchw.dtype).itemsize
    max_tc = max(128, ((2 << 20) // max(TR * bytes_per_elem, 1)) // 128 * 128)
    TC = _pick_tile(HW, 128, max_tc)

    grid = (BC // TR, HW // TC)

    # TODO(synk): add input_output_aliases={2: 0} if the caller can donate the
    # feature map (saves the second B*C*H*W HBM allocation).
    out_rows = pl.pallas_call(
        _film_kernel,
        out_shape=jax.ShapeDtypeStruct((BC, HW), conv_filters_nchw.dtype),
        grid_spec=pltpu.PrefetchScalarGridSpec(
            num_scalar_prefetch=0,
            grid=grid,
            in_specs=[
                pl.BlockSpec((TR, 1), lambda i, j: (i, 0)),    # scale (j-invariant)
                pl.BlockSpec((TR, 1), lambda i, j: (i, 0)),    # shift (j-invariant)
                pl.BlockSpec((TR, TC), lambda i, j: (i, j)),   # x tile
            ],
            out_specs=pl.BlockSpec((TR, TC), lambda i, j: (i, j)),
        ),
        compiler_params=pltpu.CompilerParams(
            dimension_semantics=("parallel", "parallel"),
            vmem_limit_bytes=64 << 20),
    )(scale_rows, shift_rows, x_rows)

    return out_rows.reshape(B, C, H, W)


def _reference(conv_filters_nchw, context, w_add, b_add, w_mul, b_mul):
    proj_add = context @ w_add + b_add          # (B, C)
    proj_mul = context @ w_mul + b_mul          # (B, C)
    x = jnp.transpose(conv_filters_nchw, (0, 2, 3, 1))   # (B, H, W, C)
    res = (1.0 + proj_mul[:, None, None, :]) * x + proj_add[:, None, None, :]
    return jnp.transpose(res, (0, 3, 1, 2))


if __name__ == "__main__":
    B, C, H, W = 2, 4, 16, 16
    CTX = 8

    key = jax.random.PRNGKey(0)
    k_x, k_ctx, k_wa, k_ba, k_wm, k_bm = jax.random.split(key, 6)

    conv_filters = jax.random.normal(k_x, (B, C, H, W), dtype=jnp.float32)
    context = jax.random.normal(k_ctx, (B, CTX), dtype=jnp.float32)

    # Parameters. The PyTorch module zero-initializes both Linear layers;
    # we use small deterministic non-zero values so the kernel's compute path
    # is actually exercised (forward() semantics are unchanged).
    w_add = 0.1 * jax.random.normal(k_wa, (CTX, C), dtype=jnp.float32)
    b_add = 0.1 * jax.random.normal(k_ba, (C,), dtype=jnp.float32)
    w_mul = 0.1 * jax.random.normal(k_wm, (CTX, C), dtype=jnp.float32)
    b_mul = 0.1 * jax.random.normal(k_bm, (C,), dtype=jnp.float32)

    out = film_conditioning(conv_filters, context, w_add, b_add, w_mul, b_mul)
    out = jax.block_until_ready(out)

    ref = _reference(conv_filters, context, w_add, b_add, w_mul, b_mul)
    assert out.shape == (B, C, H, W)
    assert jnp.allclose(out, ref, atol=1e-5, rtol=1e-5), "mismatch vs reference"

    # Zero-init case (the module's actual __init__): must be an identity map.
    zeros_w = jnp.zeros((CTX, C), jnp.float32)
    zeros_b = jnp.zeros((C,), jnp.float32)
    out_id = jax.block_until_ready(
        film_conditioning(conv_filters, context, zeros_w, zeros_b, zeros_w, zeros_b))
    assert jnp.allclose(out_id, conv_filters, atol=1e-6)

    print("KERNEL_OK")
</pallas_src>

<mosaic_0001>
module attributes {stable_mosaic.version = 11 : i64} {
  func.func @_film_kernel(%arg0: i32, %arg1: i32, %arg2: memref<8x1xf32, #tpu.memory_space<vmem>>, %arg3: memref<8x1xf32, #tpu.memory_space<vmem>>, %arg4: memref<8x256xf32, #tpu.memory_space<vmem>>, %arg5: memref<8x256xf32, #tpu.memory_space<vmem>>) attributes {dimension_semantics = [#tpu.dimension_semantics<parallel>, #tpu.dimension_semantics<parallel>], iteration_bounds = array<i64: 1, 1>, scalar_prefetch = 0 : i64, scratch_operands = 0 : i64, tpu.core_type = #tpu.core_type<tc>, window_params = [{transform_indices = @transform_0, window_bounds = array<i64: 8, 1>}, {transform_indices = @transform_1, window_bounds = array<i64: 8, 1>}, {transform_indices = @transform_2, window_bounds = array<i64: 8, 256>}, {transform_indices = @transform_3, window_bounds = array<i64: 8, 256>}]} {
    %c0 = arith.constant 0 : index
    %c0_0 = arith.constant 0 : index
    %0 = vector.load %arg4[%c0, %c0_0] : memref<8x256xf32, #tpu.memory_space<vmem>>, vector<8x256xf32>
    %c0_1 = arith.constant 0 : index
    %c0_2 = arith.constant 0 : index
    %1 = vector.load %arg2[%c0_1, %c0_2] : memref<8x1xf32, #tpu.memory_space<vmem>>, vector<8x1xf32>
    %2 = vector.broadcast %1 : vector<8x1xf32> to vector<8x256xf32>
    %3 = arith.mulf %0, %2 : vector<8x256xf32>
    %c0_3 = arith.constant 0 : index
    %c0_4 = arith.constant 0 : index
    %4 = vector.load %arg3[%c0_3, %c0_4] : memref<8x1xf32, #tpu.memory_space<vmem>>, vector<8x1xf32>
    %5 = vector.broadcast %4 : vector<8x1xf32> to vector<8x256xf32>
    %6 = arith.addf %3, %5 : vector<8x256xf32>
    %c0_5 = arith.constant 0 : index
    %c0_6 = arith.constant 0 : index
    %7 = vector.load %arg5[%c0_5, %c0_6] : memref<8x256xf32, #tpu.memory_space<vmem>>, vector<8x256xf32>
    tpu.vector_store %arg5[%c0_5, %c0_6], %6 {strides = array<i32>} : memref<8x256xf32, #tpu.memory_space<vmem>>, vector<8x256xf32>,
    return
  }
  func.func @transform_0(%arg0: i32, %arg1: i32) -> (i32, i32) {
    %c0_i32 = arith.constant 0 : i32
    %c0_i32_0 = arith.constant 0 : i32
    return %arg0, %c0_i32 : i32, i32
  }
  func.func @transform_1(%arg0: i32, %arg1: i32) -> (i32, i32) {
    %c0_i32 = arith.constant 0 : i32
    %c0_i32_0 = arith.constant 0 : i32
    return %arg0, %c0_i32 : i32, i32
  }
  func.func @transform_2(%arg0: i32, %arg1: i32) -> (i32, i32) {
    %c0_i32 = arith.constant 0 : i32
    return %arg0, %arg1 : i32, i32
  }
  func.func @transform_3(%arg0: i32, %arg1: i32) -> (i32, i32) {
    %c0_i32 = arith.constant 0 : i32
    return %arg0, %arg1 : i32, i32
  }
}

</mosaic_0001>

<llo_original>
// kernel: film_conditioning.1
$region0: #{film_conditioning.1}
  #allocation0 [shape = 'u32[]', space=smem, size = 0x4, offset = 0x4, fixed_abs, tag = 'smem constant byte address 0x4 - core index']
  #allocation1 [shape = 'u32[72,128]{1,0:T(1,128)}', space=vmem, size = 0x9000, scoped, tag = 'internal scratch']
  %s0 = inlined_call_operand.vmem [shape: f32[8,1], index: 0, kind: input, shape index: {}]
  %s1 = inlined_call_operand.vmem [shape: f32[8,1], index: 1, kind: input, shape index: {}]
  %s2 = inlined_call_operand.vmem [shape: f32[8,256], index: 2, kind: input, shape index: {}]
  %s3 = inlined_call_operand.vmem [shape: f32[8,256], index: 3, kind: output, shape index: {}]
  %s4 = sld [smem:[#allocation0]]
  $region22: #{film_conditioning.1} parent=0
    _
  %s6 = ssub.s32 1, %s4
  %s7 = scalar_select 0, %s6, %s4
  // Predicated region
  $region2: #{film_conditioning.1} parent=0 // pred_check
    _
  $region3: #{film_conditioning.1} parent=0 // pred_check_branch
    %9 = sbr.rel (0) target = $region5
  $region4: #{film_conditioning.1} parent=0 // pred_region
    _
  $region5: #{film_conditioning.1} parent=0 // pred_fallthru
    _
  // Predicated region
  $region6: #{film_conditioning.1} parent=0 // pred_check
    _
  $region7: #{film_conditioning.1} parent=0 // pred_check_branch
    %11 = sbr.rel (0) target = $region9
  $region8: #{film_conditioning.1} parent=0 // pred_region
    _
  $region9: #{film_conditioning.1} parent=0 // pred_fallthru
    _
  // Predicated region
  $region10: #{film_conditioning.1} parent=0 // pred_check
    _
  $region11: #{film_conditioning.1} parent=0 // pred_check_branch
    %13 = sbr.rel (0) target = $region13
  $region12: #{film_conditioning.1} parent=0 // pred_region
    _
  $region13: #{film_conditioning.1} parent=0 // pred_fallthru
    _
  %v14 = vld [vmem:[%s2] sm:$0xff]
  %v15 = vld [vmem:[%s2 + $0x8] sm:$0xff]
  %v16 = vld [vmem:[%s0] sm:$0xff]
  %18 = vset.pattern.permute.xlu0 0
  %19 = vperm.xlu0 %18, %v16
  %v20 = vpop.permute.xlu0 %19
  %v22 = vmul.f32 %v14, %v20
  %v23 = vmul.f32 %v15, %v20
  %v24 = vld [vmem:[%s1] sm:$0xff]
  %26 = vset.pattern.permute.xlu0 0
  %27 = vperm.xlu0 %26, %v24
  %v28 = vpop.permute.xlu0 %27
  %v30 = vadd.f32 %v22, %v28
  %v31 = vadd.f32 %v23, %v28
  %32 = vst [vmem:[%s3] sm:$0xff] %v30
  %33 = vst [vmem:[%s3 + $0x8] sm:$0xff] %v31
  // Predicated region
  $region14: #{film_conditioning.1} parent=0 // pred_check
    _
  $region15: #{film_conditioning.1} parent=0 // pred_check_branch
    %35 = sbr.rel (0) target = $region17
  $region16: #{film_conditioning.1} parent=0 // pred_region
    _
  $region17: #{film_conditioning.1} parent=0 // pred_fallthru
    _
  // Predicated region
  $region18: #{film_conditioning.1} parent=0 // pred_check
    _
  $region19: #{film_conditioning.1} parent=0 // pred_check_branch
    %37 = sbr.rel (0) target = $region21
  $region20: #{film_conditioning.1} parent=0 // pred_region
    _
  $region21: #{film_conditioning.1} parent=0 // pred_fallthru
    _

</llo_original>
